<compile_context>
chip_gen: v6e
topology: v6e:2x2x1
jax: 0.10.0
libtpu: 0.0.40
codegen_flags: <defaults>
</compile_context>

<pallas_src>
import functools

import jax
import jax.numpy as jnp
from jax import lax
from jax.experimental import pallas as pl
from jax.experimental.pallas import tpu as pltpu


def _valuenet_kernel(x_ref, w1_ref, b1_ref, w2_ref, b2_ref, w3_ref, b3_ref, o_ref):
    # x_ref : [B_TILE, state_dim]  bf16   (batch-major, as delivered by the env)
    # w*    : torch-native [out_features, in_features] bf16 (VMEM-resident)
    # b*    : [out_features, 1] f32
    # o_ref : [action_dim, B_TILE] f32    (lane-dense; wrapper transposes back)
    x = x_ref[...]

    # h1^T = W1 @ x^T : contract the feature axis of both operands (A @ B^T form).
    h1 = lax.dot_general(
        w1_ref[...], x, (((1,), (1,)), ((), ())),
        preferred_element_type=jnp.float32)                      # [H, B_TILE] f32
    h1 = jnp.maximum(h1 + b1_ref[...], 0.0)                      # bias + ReLU on f32 (VPU)

    h2 = jnp.dot(w2_ref[...], h1.astype(w2_ref.dtype),
                 preferred_element_type=jnp.float32)             # [H, B_TILE] f32
    h2 = jnp.maximum(h2 + b2_ref[...], 0.0)

    out = jnp.dot(w3_ref[...], h2.astype(w3_ref.dtype),
                  preferred_element_type=jnp.float32) + b3_ref[...]   # [A, B_TILE]
    o_ref[...] = out.astype(o_ref.dtype)


@functools.partial(jax.jit, static_argnames=("b_tile",))
def value_net_forward(state, params, *, b_tile=1024):
    """state: [B, state_dim] float32. params: dict of w1,b1,w2,b2,w3,b3.

    Returns action values [B, action_dim] float32 (same semantics as ValueNet.forward).
    """
    B, state_dim = state.shape
    hidden_dim = params["w1"].shape[0]
    action_dim = params["w3"].shape[0]

    # Single block if the batch is small; otherwise b_tile (multiple of 128) keeps
    # the lane-dense output block legal and the per-tile DMA fully pipelined.
    b_tile = min(b_tile, B)
    grid = (pl.cdiv(B, b_tile),)

    # bf16 activation stream: halves the dominant HBM read. In a real DQN step this
    # cast fuses into the upstream replay-buffer gather.
    x = state.astype(jnp.bfloat16)

    flops = 2 * B * (state_dim * hidden_dim + hidden_dim * hidden_dim
                     + hidden_dim * action_dim)
    bytes_accessed = (
        x.size * x.dtype.itemsize
        + B * action_dim * 4
        + sum(int(v.size) * v.dtype.itemsize for v in params.values())
    )

    # Weights/biases: constant block index -> DMA'd once, resident across the grid.
    const = lambda shape: pl.BlockSpec(shape, lambda i: (0,) * len(shape))

    out_t = pl.pallas_call(
        _valuenet_kernel,
        out_shape=jax.ShapeDtypeStruct((action_dim, B), jnp.float32),
        grid=grid,
        in_specs=[
            pl.BlockSpec((b_tile, state_dim), lambda i: (i, 0)),   # streamed batch tile
            const(params["w1"].shape), const(params["b1"].shape),
            const(params["w2"].shape), const(params["b2"].shape),
            const(params["w3"].shape), const(params["b3"].shape),
        ],
        out_specs=pl.BlockSpec((action_dim, b_tile), lambda i: (0, i)),
        compiler_params=pltpu.CompilerParams(
            dimension_semantics=("parallel",)),                    # 2x on v7x dual-TC
        cost_estimate=pl.CostEstimate(
            flops=flops, transcendentals=0, bytes_accessed=bytes_accessed),
    )(
        x,
        params["w1"], params["b1"],
        params["w2"], params["b2"],
        params["w3"], params["b3"],
    )

    return out_t.T  # back to torch layout [B, action_dim]


def init_params(key, state_dim, action_dim, hidden_dim):
    """Deterministic synthetic init standing in for the module's init_weights.

    Weights kept in torch-native [out_features, in_features] layout, stored bf16
    (MXU-native high-rate path); biases f32 with shape [out_features, 1] so they
    broadcast over the lane (batch) axis inside the kernel.
    """
    # TODO(synk): exact init_weights() scheme from algs/dqn.py is host-side and not
    # specified here; using a fan-in-scaled normal stand-in.
    k1, k2, k3 = jax.random.split(key, 3)

    def lin(k, fan_in, fan_out):
        w = (jax.random.normal(k, (fan_out, fan_in), jnp.float32)
             * (1.0 / jnp.sqrt(fan_in))).astype(jnp.bfloat16)
        b = jnp.zeros((fan_out, 1), jnp.float32)
        return w, b

    w1, b1 = lin(k1, state_dim, hidden_dim)
    w2, b2 = lin(k2, hidden_dim, hidden_dim)
    w3, b3 = lin(k3, hidden_dim, action_dim)
    return {"w1": w1, "b1": b1, "w2": w2, "b2": b2, "w3": w3, "b3": b3}


def reference_forward(state, p):
    """Pure-JAX reference mirroring the kernel's bf16-input / f32-accumulate numerics."""
    f32 = lambda a: a.astype(jnp.float32)
    x = f32(state.astype(jnp.bfloat16))
    h1 = jnp.maximum(x @ f32(p["w1"]).T + p["b1"].T, 0.0)
    h1 = f32(h1.astype(jnp.bfloat16))
    h2 = jnp.maximum(h1 @ f32(p["w2"]).T + p["b2"].T, 0.0)
    h2 = f32(h2.astype(jnp.bfloat16))
    return h2 @ f32(p["w3"]).T + p["b3"].T


if __name__ == "__main__":
    # Small shapes consistent with the module; batch chosen so the grid has >1 tile
    # (exercises the batch-streaming index maps) while staying tiny.
    batch, state_dim, action_dim, hidden_dim = 256, 16, 4, 32

    key = jax.random.PRNGKey(0)
    k_state, k_params = jax.random.split(key)
    state = jax.random.normal(k_state, (batch, state_dim), jnp.float32)
    params = init_params(k_params, state_dim, action_dim, hidden_dim)

    out = value_net_forward(state, params, b_tile=128)   # grid = (2,)
    out = jax.block_until_ready(out)

    ref = reference_forward(state, params)
    assert out.shape == (batch, action_dim)
    assert jnp.allclose(out, ref, atol=1e-4, rtol=1e-4), "mismatch vs pure-JAX reference"

    print("KERNEL_OK")
</pallas_src>

<mosaic_0001>
module attributes {stable_mosaic.version = 11 : i64} {
  func.func @_valuenet_kernel(%arg0: i32, %arg1: memref<128x16xbf16, #tpu.memory_space<vmem>>, %arg2: memref<32x16xbf16, #tpu.memory_space<vmem>>, %arg3: memref<32x1xf32, #tpu.memory_space<vmem>>, %arg4: memref<32x32xbf16, #tpu.memory_space<vmem>>, %arg5: memref<32x1xf32, #tpu.memory_space<vmem>>, %arg6: memref<4x32xbf16, #tpu.memory_space<vmem>>, %arg7: memref<4x1xf32, #tpu.memory_space<vmem>>, %arg8: memref<4x128xf32, #tpu.memory_space<vmem>>) attributes {dimension_semantics = [#tpu.dimension_semantics<parallel>], iteration_bounds = array<i64: 2>, scalar_prefetch = 0 : i64, scratch_operands = 0 : i64, tpu.core_type = #tpu.core_type<tc>, window_params = [{transform_indices = @transform_0, window_bounds = array<i64: 128, 16>}, {pipeline_mode = #tpu.pipeline_mode<synchronous>, transform_indices = @transform_1, window_bounds = array<i64: 32, 16>}, {pipeline_mode = #tpu.pipeline_mode<synchronous>, transform_indices = @transform_2, window_bounds = array<i64: 32, 1>}, {pipeline_mode = #tpu.pipeline_mode<synchronous>, transform_indices = @transform_3, window_bounds = array<i64: 32, 32>}, {pipeline_mode = #tpu.pipeline_mode<synchronous>, transform_indices = @transform_4, window_bounds = array<i64: 32, 1>}, {pipeline_mode = #tpu.pipeline_mode<synchronous>, transform_indices = @transform_5, window_bounds = array<i64: 4, 32>}, {pipeline_mode = #tpu.pipeline_mode<synchronous>, transform_indices = @transform_6, window_bounds = array<i64: 4, 1>}, {transform_indices = @transform_7, window_bounds = array<i64: 4, 128>}]} {
    %c0 = arith.constant 0 : index
    %c0_0 = arith.constant 0 : index
    %0 = vector.load %arg1[%c0, %c0_0] : memref<128x16xbf16, #tpu.memory_space<vmem>>, vector<128x16xbf16>
    %c0_1 = arith.constant 0 : index
    %c0_2 = arith.constant 0 : index
    %1 = vector.load %arg2[%c0_1, %c0_2] : memref<32x16xbf16, #tpu.memory_space<vmem>>, vector<32x16xbf16>
    %cst = arith.constant dense<0.000000e+00> : vector<32x128xf32>
    %2 = tpu.matmul %1, %0, %cst {dimension_numbers = #tpu.dot_dimension_numbers<[1], [1], [0], [0], [0, 0, 1, 0], [], []>} : vector<32x16xbf16>, vector<128x16xbf16>, vector<32x128xf32> -> vector<32x128xf32>
    %c0_3 = arith.constant 0 : index
    %c0_4 = arith.constant 0 : index
    %3 = vector.load %arg3[%c0_3, %c0_4] : memref<32x1xf32, #tpu.memory_space<vmem>>, vector<32x1xf32>
    %4 = vector.broadcast %3 : vector<32x1xf32> to vector<32x128xf32>
    %5 = arith.addf %2, %4 : vector<32x128xf32>
    %cst_5 = arith.constant 0.000000e+00 : f32
    %6 = vector.broadcast %cst_5 : f32 to vector<32x128xf32>
    %7 = arith.maximumf %5, %6 : vector<32x128xf32>
    %c0_6 = arith.constant 0 : index
    %c0_7 = arith.constant 0 : index
    %8 = vector.load %arg4[%c0_6, %c0_7] : memref<32x32xbf16, #tpu.memory_space<vmem>>, vector<32x32xbf16>
    %9 = arith.truncf %7 : vector<32x128xf32> to vector<32x128xbf16>
    %cst_8 = arith.constant dense<0.000000e+00> : vector<32x128xf32>
    %10 = tpu.matmul %8, %9, %cst_8 {dimension_numbers = #tpu.dot_dimension_numbers<[1], [0], [0], [1], [0, 0, 1, 1], [], []>} : vector<32x32xbf16>, vector<32x128xbf16>, vector<32x128xf32> -> vector<32x128xf32>
    %c0_9 = arith.constant 0 : index
    %c0_10 = arith.constant 0 : index
    %11 = vector.load %arg5[%c0_9, %c0_10] : memref<32x1xf32, #tpu.memory_space<vmem>>, vector<32x1xf32>
    %12 = vector.broadcast %11 : vector<32x1xf32> to vector<32x128xf32>
    %13 = arith.addf %10, %12 : vector<32x128xf32>
    %cst_11 = arith.constant 0.000000e+00 : f32
    %14 = vector.broadcast %cst_11 : f32 to vector<32x128xf32>
    %15 = arith.maximumf %13, %14 : vector<32x128xf32>
    %c0_12 = arith.constant 0 : index
    %c0_13 = arith.constant 0 : index
    %16 = vector.load %arg6[%c0_12, %c0_13] : memref<4x32xbf16, #tpu.memory_space<vmem>>, vector<4x32xbf16>
    %17 = arith.truncf %15 : vector<32x128xf32> to vector<32x128xbf16>
    %cst_14 = arith.constant dense<0.000000e+00> : vector<4x128xf32>
    %18 = tpu.matmul %16, %17, %cst_14 {dimension_numbers = #tpu.dot_dimension_numbers<[1], [0], [0], [1], [0, 0, 1, 1], [], []>} : vector<4x32xbf16>, vector<32x128xbf16>, vector<4x128xf32> -> vector<4x128xf32>
    %c0_15 = arith.constant 0 : index
    %c0_16 = arith.constant 0 : index
    %19 = vector.load %arg7[%c0_15, %c0_16] : memref<4x1xf32, #tpu.memory_space<vmem>>, vector<4x1xf32>
    %20 = vector.broadcast %19 : vector<4x1xf32> to vector<4x128xf32>
    %21 = arith.addf %18, %20 : vector<4x128xf32>
    %c0_17 = arith.constant 0 : index
    %c0_18 = arith.constant 0 : index
    %22 = vector.load %arg8[%c0_17, %c0_18] : memref<4x128xf32, #tpu.memory_space<vmem>>, vector<4x128xf32>
    tpu.vector_store %arg8[%c0_17, %c0_18], %21 {strides = array<i32>} : memref<4x128xf32, #tpu.memory_space<vmem>>, vector<4x128xf32>,
    return
  }
  func.func @transform_0(%arg0: i32) -> (i32, i32) {
    %c0_i32 = arith.constant 0 : i32
    %c0_i32_0 = arith.constant 0 : i32
    return %arg0, %c0_i32 : i32, i32
  }
  func.func @transform_1(%arg0: i32) -> (i32, i32) {
    %c0_i32 = arith.constant 0 : i32
    %c0_i32_0 = arith.constant 0 : i32
    %c0_i32_1 = arith.constant 0 : i32
    return %c0_i32, %c0_i32_0 : i32, i32
  }
  func.func @transform_2(%arg0: i32) -> (i32, i32) {
    %c0_i32 = arith.constant 0 : i32
    %c0_i32_0 = arith.constant 0 : i32
    %c0_i32_1 = arith.constant 0 : i32
    return %c0_i32, %c0_i32_0 : i32, i32
  }
  func.func @transform_3(%arg0: i32) -> (i32, i32) {
    %c0_i32 = arith.constant 0 : i32
    %c0_i32_0 = arith.constant 0 : i32
    %c0_i32_1 = arith.constant 0 : i32
    return %c0_i32, %c0_i32_0 : i32, i32
  }
  func.func @transform_4(%arg0: i32) -> (i32, i32) {
    %c0_i32 = arith.constant 0 : i32
    %c0_i32_0 = arith.constant 0 : i32
    %c0_i32_1 = arith.constant 0 : i32
    return %c0_i32, %c0_i32_0 : i32, i32
  }
  func.func @transform_5(%arg0: i32) -> (i32, i32) {
    %c0_i32 = arith.constant 0 : i32
    %c0_i32_0 = arith.constant 0 : i32
    %c0_i32_1 = arith.constant 0 : i32
    return %c0_i32, %c0_i32_0 : i32, i32
  }
  func.func @transform_6(%arg0: i32) -> (i32, i32) {
    %c0_i32 = arith.constant 0 : i32
    %c0_i32_0 = arith.constant 0 : i32
    %c0_i32_1 = arith.constant 0 : i32
    return %c0_i32, %c0_i32_0 : i32, i32
  }
  func.func @transform_7(%arg0: i32) -> (i32, i32) {
    %c0_i32 = arith.constant 0 : i32
    %c0_i32_0 = arith.constant 0 : i32
    return %c0_i32, %arg0 : i32, i32
  }
}

</mosaic_0001>

<llo_original>
// kernel: value_net_forward.1
$region0: #{value_net_forward.1}
  #allocation0 [shape = 'u32[]', space=smem, size = 0x4, offset = 0x4, fixed_abs, tag = 'smem constant byte address 0x4 - core index']
  #allocation1 [shape = 'u32[144,128]{1,0:T(1,128)}', space=vmem, size = 0x12000, scoped, tag = 'internal scratch']
  %s0 = inlined_call_operand.vmem [shape: bf16[256,16], index: 0, kind: input, shape index: {}]
  %s1 = inlined_call_operand.vmem [shape: bf16[32,16], index: 1, kind: input, shape index: {}]
  %s2 = inlined_call_operand.vmem [shape: f32[32,1], index: 2, kind: input, shape index: {}]
  %s3 = inlined_call_operand.vmem [shape: bf16[32,32], index: 3, kind: input, shape index: {}]
  %s4 = inlined_call_operand.vmem [shape: f32[32,1], index: 4, kind: input, shape index: {}]
  %s5 = inlined_call_operand.vmem [shape: bf16[4,32], index: 5, kind: input, shape index: {}]
  %s6 = inlined_call_operand.vmem [shape: f32[4,1], index: 6, kind: input, shape index: {}]
  %s7 = inlined_call_operand.hbm [shape: f32[4,256], index: 7, kind: output, shape index: {}]
  %s8 = sld [smem:[#allocation0]]
  $region61: #{value_net_forward.1} parent=0
    _
  %s10 = ssub.s32 1, %s8
  %s11 = scalar_select 0, %s10, %s8
  $region1: #{value_net_forward.1} parent=0
    #allocation2 [shape = 'u8[4096]{0}', space=vmem, size = 0x1000, scoped, tag = 'output window, operand 0']
    #allocation3 [shape = 's32[2]{0}', space=sflag, size = 0x8, scoped, tag = 'scoped memory for value_net_forward.1']
    %12 = vsyncpa [#allocation3], 0
    %s13 = scalar_lea.sflag [#allocation3], 1
    %14 = vsyncpa %s13, 0
    loop: start=0, step=1, limit=4
    $region2: #{value_net_forward.1} parent=1 // loop_pre_header
      _
    $region3: #{value_net_forward.1} parent=1 // loop_header
      %s16 = sphi 0, %s20
      %p17 = scmp.ge.s32.totalorder %s16, 4
      %s26 = sphi 0, %s28
      %s29 = sphi 0, %s26
      %s30 = sphi 0, %s29
      %s46 = sphi 0, %s30
      %s50 = sphi 0, %s50
      %s52 = sphi 0, %s50
      %s53 = sphi 0, %s52
      %s67 = sphi 0, %s53
      %s71 = sphi 0, %s71
      %s73 = sphi 0, %s71
      %s74 = sphi 0, %s73
      %s88 = sphi 0, %s74
      %s92 = sphi 0, %s92
      %s94 = sphi 0, %s92
      %s95 = sphi 0, %s94
      %s109 = sphi 0, %s95
      %s113 = sphi 0, %s113
      %s115 = sphi 0, %s113
      %s116 = sphi 0, %s115
      %s130 = sphi 0, %s116
      %s134 = sphi 0, %s134
      %s136 = sphi 0, %s134
      %s137 = sphi 0, %s136
      %s151 = sphi 0, %s137
      %s155 = sphi 0, %s155
      %s157 = sphi 0, %s155
      %s158 = sphi 0, %s157
      %s172 = sphi 0, %s158
      %s178 = sphi 0, %s180
      %s181 = sphi 0, %s178
      %s182 = sphi 0, %s181
      %s198 = sphi 0, %s182
    $region4: #{value_net_forward.1} parent=1 // loop_header_branch
      %19 = sbr.rel (%p17) target = $region8
    $region5: #{value_net_forward.1} parent=1 // loop_body
      %s21 = ssub.s32 %s16, 1
      %s22 = ssub.s32 %s16, 2
      %s23 = sadd.s32 %s16, 1
      %s24 = ssub.s32 %s16, %s23
      %p25 = scmp.eq.s32.totalorder %s24, 0
      %s27 = sadd.s32 %s26, 1
      %s28 = scalar_select %p25, %s26, %s27
      %p31 = pneg %p25
      %p32 = scmp.eq.s32.totalorder %s16, 1
      %p33 = por %p31, %p32
      %p34 = scmp.ne.s32.totalorder %s26, %s29
      %p35 = scmp.eq.s32.totalorder %s16, 0
      %p36 = por %p34, %p35
      %p37 = scmp.ne.s32.totalorder %s26, %s29
      %p38 = scmp.eq.s32.totalorder %s21, 1
      %p39 = por %p37, %p38
      %p40 = scmp.ne.s32.totalorder %s29, %s30
      %p41 = scmp.eq.s32.totalorder %s21, 0
      %p42 = por %p40, %p41
      %p43 = scmp.ne.s32.totalorder %s29, %s30
      %p44 = scmp.eq.s32.totalorder %s22, 1
      %p45 = por %p43, %p44
      %p47 = scmp.ne.s32.totalorder %s30, %s46
      %p48 = scmp.eq.s32.totalorder %s22, 0
      %p49 = por %p47, %p48
      %s51 = sadd.s32 %s50, 1
      %p54 = scmp.eq.s32.totalorder %s16, 1
      %p55 = scmp.ne.s32.totalorder %s50, %s52
      %p56 = scmp.eq.s32.totalorder %s16, 0
      %p57 = por %p55, %p56
      %p58 = scmp.ne.s32.totalorder %s50, %s52
      %p59 = scmp.eq.s32.totalorder %s21, 1
      %p60 = por %p58, %p59
      %p61 = scmp.ne.s32.totalorder %s52, %s53
      %p62 = scmp.eq.s32.totalorder %s21, 0
      %p63 = por %p61, %p62
      %p64 = scmp.ne.s32.totalorder %s52, %s53
      %p65 = scmp.eq.s32.totalorder %s22, 1
      %p66 = por %p64, %p65
      %p68 = scmp.ne.s32.totalorder %s53, %s67
      %p69 = scmp.eq.s32.totalorder %s22, 0
      %p70 = por %p68, %p69
      %s72 = sadd.s32 %s71, 1
      %p75 = scmp.eq.s32.totalorder %s16, 1
      %p76 = scmp.ne.s32.totalorder %s71, %s73
      %p77 = scmp.eq.s32.totalorder %s16, 0
      %p78 = por %p76, %p77
      %p79 = scmp.ne.s32.totalorder %s71, %s73
      %p80 = scmp.eq.s32.totalorder %s21, 1
      %p81 = por %p79, %p80
      %p82 = scmp.ne.s32.totalorder %s73, %s74
      %p83 = scmp.eq.s32.totalorder %s21, 0
      %p84 = por %p82, %p83
      %p85 = scmp.ne.s32.totalorder %s73, %s74
      %p86 = scmp.eq.s32.totalorder %s22, 1
      %p87 = por %p85, %p86
      %p89 = scmp.ne.s32.totalorder %s74, %s88
      %p90 = scmp.eq.s32.totalorder %s22, 0
      %p91 = por %p89, %p90
      %s93 = sadd.s32 %s92, 1
      %p96 = scmp.eq.s32.totalorder %s16, 1
      %p97 = scmp.ne.s32.totalorder %s92, %s94
      %p98 = scmp.eq.s32.totalorder %s16, 0
      %p99 = por %p97, %p98
      %p100 = scmp.ne.s32.totalorder %s92, %s94
      %p101 = scmp.eq.s32.totalorder %s21, 1
      %p102 = por %p100, %p101
      %p103 = scmp.ne.s32.totalorder %s94, %s95
      %p104 = scmp.eq.s32.totalorder %s21, 0
      %p105 = por %p103, %p104
      %p106 = scmp.ne.s32.totalorder %s94, %s95
      %p107 = scmp.eq.s32.totalorder %s22, 1
      %p108 = por %p106, %p107
      %p110 = scmp.ne.s32.totalorder %s95, %s109
      %p111 = scmp.eq.s32.totalorder %s22, 0
      %p112 = por %p110, %p111
      %s114 = sadd.s32 %s113, 1
      %p117 = scmp.eq.s32.totalorder %s16, 1
      %p118 = scmp.ne.s32.totalorder %s113, %s115
      %p119 = scmp.eq.s32.totalorder %s16, 0
      %p120 = por %p118, %p119
      %p121 = scmp.ne.s32.totalorder %s113, %s115
      %p122 = scmp.eq.s32.totalorder %s21, 1
      %p123 = por %p121, %p122
      %p124 = scmp.ne.s32.totalorder %s115, %s116
      %p125 = scmp.eq.s32.totalorder %s21, 0
      %p126 = por %p124, %p125
      %p127 = scmp.ne.s32.totalorder %s115, %s116
      %p128 = scmp.eq.s32.totalorder %s22, 1
      %p129 = por %p127, %p128
      %p131 = scmp.ne.s32.totalorder %s116, %s130
      %p132 = scmp.eq.s32.totalorder %s22, 0
      %p133 = por %p131, %p132
      %s135 = sadd.s32 %s134, 1
      %p138 = scmp.eq.s32.totalorder %s16, 1
      %p139 = scmp.ne.s32.totalorder %s134, %s136
      %p140 = scmp.eq.s32.totalorder %s16, 0
      %p141 = por %p139, %p140
      %p142 = scmp.ne.s32.totalorder %s134, %s136
      %p143 = scmp.eq.s32.totalorder %s21, 1
      %p144 = por %p142, %p143
      %p145 = scmp.ne.s32.totalorder %s136, %s137
      %p146 = scmp.eq.s32.totalorder %s21, 0
      %p147 = por %p145, %p146
      %p148 = scmp.ne.s32.totalorder %s136, %s137
      %p149 = scmp.eq.s32.totalorder %s22, 1
      %p150 = por %p148, %p149
      %p152 = scmp.ne.s32.totalorder %s137, %s151
      %p153 = scmp.eq.s32.totalorder %s22, 0
      %p154 = por %p152, %p153
      %s156 = sadd.s32 %s155, 1
      %p159 = scmp.eq.s32.totalorder %s16, 1
      %p160 = scmp.ne.s32.totalorder %s155, %s157
      %p161 = scmp.eq.s32.totalorder %s16, 0
      %p162 = por %p160, %p161
      %p163 = scmp.ne.s32.totalorder %s155, %s157
      %p164 = scmp.eq.s32.totalorder %s21, 1
      %p165 = por %p163, %p164
      %p166 = scmp.ne.s32.totalorder %s157, %s158
      %p167 = scmp.eq.s32.totalorder %s21, 0
      %p168 = por %p166, %p167
      %p169 = scmp.ne.s32.totalorder %s157, %s158
      %p170 = scmp.eq.s32.totalorder %s22, 1
      %p171 = por %p169, %p170
      %p173 = scmp.ne.s32.totalorder %s158, %s172
      %p174 = scmp.eq.s32.totalorder %s22, 0
      %p175 = por %p173, %p174
      %s176 = ssub.s32 %s16, %s23
      %p177 = scmp.eq.s32.totalorder %s176, 0
      %s179 = sadd.s32 %s178, 1
      %s180 = scalar_select %p177, %s178, %s179
      %p183 = pneg %p177
      %p184 = scmp.eq.s32.totalorder %s16, 1
      %p185 = por %p183, %p184
      %p186 = scmp.ne.s32.totalorder %s178, %s181
      %p187 = scmp.eq.s32.totalorder %s16, 0
      %p188 = por %p186, %p187
      %p189 = scmp.ne.s32.totalorder %s178, %s181
      %p190 = scmp.eq.s32.totalorder %s21, 1
      %p191 = por %p189, %p190
      %p192 = scmp.ne.s32.totalorder %s181, %s182
      %p193 = scmp.eq.s32.totalorder %s21, 0
      %p194 = por %p192, %p193
      %p195 = scmp.ne.s32.totalorder %s181, %s182
      %p196 = scmp.eq.s32.totalorder %s22, 1
      %p197 = por %p195, %p196
      %p199 = scmp.ne.s32.totalorder %s182, %s198
      %p200 = scmp.eq.s32.totalorder %s22, 0
      %p201 = por %p199, %p200
      %p202 = scmp.le.s32.totalorder 1, %s16
      %p203 = scmp.lt.s32.totalorder %s16, 3
      %p204 = pnand %p202, %p203
      %p205 = pneg %p204
      // Predicated region
      $region9: #{value_net_forward.1} parent=5 // pred_check
        _
      $region10: #{value_net_forward.1} parent=5 // pred_check_branch
        %207 = sbr.rel (%p204) target = $region12
      $region11: #{value_net_forward.1} parent=5 // pred_region
        %s208 = ssub.s32 %s16, 1
        // Predicated region
        $region13: #{value_net_forward.1} parent=11 // pred_check
          %p209 = pneg %p63
        $region14: #{value_net_forward.1} parent=11 // pred_check_branch
          %211 = sbr.rel (%p209) target = $region16
        $region15: #{value_net_forward.1} parent=11 // pred_region
          _
        $region16: #{value_net_forward.1} parent=11 // pred_fallthru
          _
        // Predicated region
        $region17: #{value_net_forward.1} parent=11 // pred_check
          %p212 = pneg %p84
        $region18: #{value_net_forward.1} parent=11 // pred_check_branch
          %214 = sbr.rel (%p212) target = $region20
        $region19: #{value_net_forward.1} parent=11 // pred_region
          _
        $region20: #{value_net_forward.1} parent=11 // pred_fallthru
          _
        // Predicated region
        $region21: #{value_net_forward.1} parent=11 // pred_check
          %p215 = pneg %p105
        $region22: #{value_net_forward.1} parent=11 // pred_check_branch
          %217 = sbr.rel (%p215) target = $region24
        $region23: #{value_net_forward.1} parent=11 // pred_region
          _
        $region24: #{value_net_forward.1} parent=11 // pred_fallthru
          _
        // Predicated region
        $region25: #{value_net_forward.1} parent=11 // pred_check
          %p218 = pneg %p126
        $region26: #{value_net_forward.1} parent=11 // pred_check_branch
          %220 = sbr.rel (%p218) target = $region28
        $region27: #{value_net_forward.1} parent=11 // pred_region
          _
        $region28: #{value_net_forward.1} parent=11 // pred_fallthru
          _
        // Predicated region
        $region29: #{value_net_forward.1} parent=11 // pred_check
          %p221 = pneg %p147
        $region30: #{value_net_forward.1} parent=11 // pred_check_branch
          %223 = sbr.rel (%p221) target = $region32
        $region31: #{value_net_forward.1} parent=11 // pred_region
          _
        $region32: #{value_net_forward.1} parent=11 // pred_fallthru
          _
        // Predicated region
        $region33: #{value_net_forward.1} parent=11 // pred_check
          %p224 = pneg %p168
        $region34: #{value_net_forward.1} parent=11 // pred_check_branch
          %226 = sbr.rel (%p224) target = $region36
        $region35: #{value_net_forward.1} parent=11 // pred_region
          _
        $region36: #{value_net_forward.1} parent=11 // pred_fallthru
          _
      $region12: #{value_net_forward.1} parent=5 // pred_fallthru
        _
      %p227 = scmp.lt.s32.totalorder %s16, 2
      // Predicated region
      $region37: #{value_net_forward.1} parent=5 // pred_check
        %p228 = pneg %p227
      $region38: #{value_net_forward.1} parent=5 // pred_check_branch
        %230 = sbr.rel (%p228) target = $region40
      $region39: #{value_net_forward.1} parent=5 // pred_region
        // Predicated region
        $region41: #{value_net_forward.1} parent=39 // pred_check
          %p231 = pneg %p36
        $region42: #{value_net_forward.1} parent=39 // pred_check_branch
          %233 = sbr.rel (%p231) target = $region44
        $region43: #{value_net_forward.1} parent=39 // pred_region
          %s234 = smul.u32 16, %s16
          %p235 = scmp.lt.s32.totalorder %s234, 31
          %s236 = scalar_select %p235, %s234, 31
          %s237 = smul.addr %s236, 4
          %s238 = scalar_lea.vmem %s0, %s237
          %s239 = smul.u32 16, %s16
        $region44: #{value_net_forward.1} parent=39 // pred_fallthru
          _
      $region40: #{value_net_forward.1} parent=5 // pred_fallthru
        _
      %p240 = scmp.le.s32.totalorder 1, %s16
      %p241 = scmp.lt.s32.totalorder %s16, 3
      %p242 = pnand %p240, %p241
      %p243 = pneg %p242
      // Predicated region
      $region45: #{value_net_forward.1} parent=5 // pred_check
        _
      $region46: #{value_net_forward.1} parent=5 // pred_check_branch
        %245 = sbr.rel (%p242) target = $region48
      $region47: #{value_net_forward.1} parent=5 // pred_region
        %s246 = ssub.s32 %s16, 1
        %s247 = smul.u32 16, %s21
        %p248 = scmp.lt.s32.totalorder %s247, 31
        %s249 = scalar_select %p248, %s247, 31
        %s250 = smul.addr %s249, 4
        %s251 = scalar_lea.vmem %s0, %s250
        %p252 = pneg %p42
        %p253 = pneg %p39
        %p254 = pneg %p63
        %p255 = pneg %p60
        %p256 = pneg %p84
        %p257 = pneg %p81
        %p258 = pneg %p105
        %p259 = pneg %p102
        %p260 = pneg %p126
        %p261 = pneg %p123
        %p262 = pneg %p147
        %p263 = pneg %p144
        %p264 = pneg %p168
        %p265 = pneg %p165
        %p266 = pneg %p194
        %p267 = pneg %p191
        %s268 = sand.u32 %s181, 1
        %s269 = scalar_lea.sflag [#allocation3], %s268
        %s270 = sand.u32 %s181, 1
        %s271 = smul.addr %s270, 4
        %s272 = scalar_lea.vmem [#allocation2], %s271
        %s273 = smul.u32 16, %s21
        %p274 = scmp.lt.s32.totalorder %s273, 31
        %s275 = scalar_select %p274, %s273, 31
        %s276 = smul.addr %s275, 4
        %s277 = scalar_lea.vmem %s0, %s276
        %s278 = smul.u32 16, %s21
        %v280 = vld [vmem:[%s277] sm:$0xf]
        %v281 = vld [vmem:[%s277 + $0x4] sm:$0xf]
        %v282 = vld [vmem:[%s277 + $0x8] sm:$0xf]
        %v283 = vld [vmem:[%s277 + $0xc] sm:$0xf]
        %v284 = vld [vmem:[%s277 + $0x10] sm:$0xf]
        %v285 = vld [vmem:[%s277 + $0x14] sm:$0xf]
        %v286 = vld [vmem:[%s277 + $0x18] sm:$0xf]
        %v287 = vld [vmem:[%s277 + $0x1c] sm:$0xf]
        %v288 = vld [vmem:[%s277 + $0x20] sm:$0xf]
        %v289 = vld [vmem:[%s277 + $0x24] sm:$0xf]
        %v290 = vld [vmem:[%s277 + $0x28] sm:$0xf]
        %v291 = vld [vmem:[%s277 + $0x2c] sm:$0xf]
        %v292 = vld [vmem:[%s277 + $0x30] sm:$0xf]
        %v293 = vld [vmem:[%s277 + $0x34] sm:$0xf]
        %v294 = vld [vmem:[%s277 + $0x38] sm:$0xf]
        %v295 = vld [vmem:[%s277 + $0x3c] sm:$0xf]
        %v296 = vld [vmem:[%s1] sm:$0xf]
        %v297 = vld [vmem:[%s1 + $0x4] sm:$0xf]
        %v298 = vld [vmem:[%s1 + $0x8] sm:$0xf]
        %v299 = vld [vmem:[%s1 + $0xc] sm:$0xf]
        %v300 = vld [vmem:[%s2] sm:$0xff]
        %v301 = vld [vmem:[%s2 + $0x8] sm:$0xff]
        %v302 = vld [vmem:[%s2 + $0x10] sm:$0xff]
        %v303 = vld [vmem:[%s2 + $0x18] sm:$0xff]
        %305 = vset.pattern.permute.xlu0 0
        %306 = vperm.xlu0 %305, %v300
        %v307 = vpop.permute.xlu0 %306
        %310 = vset.pattern.permute.xlu0 0
        %311 = vperm.xlu0 %310, %v301
        %v312 = vpop.permute.xlu0 %311
        %315 = vset.pattern.permute.xlu0 0
        %316 = vperm.xlu0 %315, %v302
        %v317 = vpop.permute.xlu0 %316
        %320 = vset.pattern.permute.xlu0 0
        %321 = vperm.xlu0 %320, %v303
        %v322 = vpop.permute.xlu0 %321
        %v328 = vunpack.c.l.b16 %v296
        %v329 = vunpack.c.l.b16 %v297
        %v330 = vunpack.c.l.b16 %v298
        %v331 = vunpack.c.l.b16 %v299
        %v332 = vpack.c.b16 %v329, %v328
        %v333 = vpack.c.b16 %v331, %v330
        %v350 = vunpack.c.l.b16 %v280
        %v351 = vunpack.c.l.b16 %v281
        %v352 = vunpack.c.l.b16 %v282
        %v353 = vunpack.c.l.b16 %v283
        %v354 = vunpack.c.l.b16 %v284
        %v355 = vunpack.c.l.b16 %v285
        %v356 = vunpack.c.l.b16 %v286
        %v357 = vunpack.c.l.b16 %v287
        %v358 = vunpack.c.l.b16 %v288
        %v359 = vunpack.c.l.b16 %v289
        %v360 = vunpack.c.l.b16 %v290
        %v361 = vunpack.c.l.b16 %v291
        %v362 = vunpack.c.l.b16 %v292
        %v363 = vunpack.c.l.b16 %v293
        %v364 = vunpack.c.l.b16 %v294
        %v365 = vunpack.c.l.b16 %v295
        %v366 = vpack.c.b16 %v351, %v350
        %v367 = vpack.c.b16 %v353, %v352
        %v368 = vpack.c.b16 %v355, %v354
        %v369 = vpack.c.b16 %v357, %v356
        %v370 = vpack.c.b16 %v359, %v358
        %v371 = vpack.c.b16 %v361, %v360
        %v372 = vpack.c.b16 %v363, %v362
        %v373 = vpack.c.b16 %v365, %v364
        %vm374 = vcmask 130048
        %v376 = vsel %vm374, %v332, 0
        %v379 = vsel %vm374, %v333, 0
        %v382 = vsel %vm374, %v366, 0
        %v385 = vsel %vm374, %v367, 0
        %v388 = vsel %vm374, %v368, 0
        %v391 = vsel %vm374, %v369, 0
        %v394 = vsel %vm374, %v370, 0
        %v397 = vsel %vm374, %v371, 0
        %v400 = vsel %vm374, %v372, 0
        %v403 = vsel %vm374, %v373, 0
        %405 = vmatprep.subr.bf16.mxu0 0
        %406 = vmatpush1.bf16.xpose.msra.mxu0 %v403
        %407 = vmatprep.subr.bf16.mxu0 0
        %408 = vmatpush1.bf16.xpose.msra.mxu0 %v400
        %409 = vmatprep.subr.bf16.mxu0 0
        %410 = vmatpush1.bf16.xpose.msra.mxu0 %v397
        %411 = vmatprep.subr.bf16.mxu0 0
        %412 = vmatpush1.bf16.xpose.msra.mxu0 %v394
        %413 = vmatprep.subr.bf16.mxu0 0
        %414 = vmatpush1.bf16.xpose.msra.mxu0 %v391
        %415 = vmatprep.subr.bf16.mxu0 0
        %416 = vmatpush1.bf16.xpose.msra.mxu0 %v388
        %417 = vmatprep.subr.bf16.mxu0 0
        %418 = vmatpush1.bf16.xpose.msra.mxu0 %v385
        %419 = vmatprep.subr.bf16.mxu0 0
        %420 = vmatpush1.bf16.xpose.msra.mxu0 %v382
        %421 = vmatprep.subr.bf16.mxu0 0
        %422 = vmatpush2.bf16.xpose.msra.mxu0 0
        %423 = vmatprep.subr.bf16.mxu0 0
        %424 = vmatpush2.bf16.xpose.msra.mxu0 0
        %425 = vmatprep.subr.bf16.mxu0 0
        %426 = vmatpush2.bf16.xpose.msra.mxu0 0
        %427 = vmatprep.subr.bf16.mxu0 0
        %428 = vmatpush2.bf16.xpose.msra.mxu0 0
        %429 = vmatprep.subr.bf16.mxu0 0
        %430 = vmatpush2.bf16.xpose.msra.mxu0 0
        %431 = vmatprep.subr.bf16.mxu0 0
        %432 = vmatpush2.bf16.xpose.msra.mxu0 0
        %433 = vmatprep.subr.bf16.mxu0 0
        %434 = vmatpush2.bf16.xpose.msra.mxu0 0
        %435 = vmatprep.subr.bf16.mxu0 0
        %436 = vmatpush2.bf16.xpose.msra.mxu0 0
        %437 = vmatprep.mubr.bf16.mxu0 0
        %438 = vmatmul.mubr.bf16.gmra.mxu0 %v376
        %v439 = vpop.f32.mrf.mxu0
        %v440 = vadd.f32 %v307, %v439
        %v441 = vpop.f32.mrf.mxu0
        %v442 = vpop.f32.mrf.mxu0
        %v443 = vadd.f32 %v312, %v442
        %v444 = vpop.f32.mrf.mxu0
        %445 = vmatprep.mubr.bf16.mxu0 0
        %446 = vmatmul.mubr.bf16.gmra.mxu0 %v379
        %v447 = vpop.f32.mrf.mxu0
        %v448 = vadd.f32 %v317, %v447
        %v449 = vpop.f32.mrf.mxu0
        %v450 = vpop.f32.mrf.mxu0
        %v451 = vadd.f32 %v322, %v450
        %v452 = vpop.f32.mrf.mxu0
        %453 = vdwg.mxu0
        %v454 = vmax.f32 %v440, 0.0
        %v455 = vmax.f32 %v443, 0.0
        %v456 = vmax.f32 %v448, 0.0
        %v457 = vmax.f32 %v451, 0.0
        %v458 = vld [vmem:[%s3] sm:$0xf]
        %v459 = vld [vmem:[%s3 + $0x4] sm:$0xf]
        %v460 = vld [vmem:[%s3 + $0x8] sm:$0xf]
        %v461 = vld [vmem:[%s3 + $0xc] sm:$0xf]
        %v462 = vpack.c.bf16 %v455, %v454
        %v463 = vpack.c.bf16 %v457, %v456
        %v464 = vld [vmem:[%s4] sm:$0xff]
        %v465 = vld [vmem:[%s4 + $0x8] sm:$0xff]
        %v466 = vld [vmem:[%s4 + $0x10] sm:$0xff]
        %v467 = vld [vmem:[%s4 + $0x18] sm:$0xff]
        %469 = vset.pattern.permute.xlu0 0
        %470 = vperm.xlu0 %469, %v464
        %v471 = vpop.permute.xlu0 %470
        %474 = vset.pattern.permute.xlu0 0
        %475 = vperm.xlu0 %474, %v465
        %v476 = vpop.permute.xlu0 %475
        %479 = vset.pattern.permute.xlu0 0
        %480 = vperm.xlu0 %479, %v466
        %v481 = vpop.permute.xlu0 %480
        %484 = vset.pattern.permute.xlu0 0
        %485 = vperm.xlu0 %484, %v467
        %v486 = vpop.permute.xlu0 %485
        %v492 = vunpack.c.l.b16 %v458
        %v493 = vunpack.c.l.b16 %v459
        %v494 = vunpack.c.l.b16 %v460
        %v495 = vunpack.c.l.b16 %v461
        %v496 = vpack.c.b16 %v493, %v492
        %v497 = vpack.c.b16 %v495, %v494
        %vm498 = vcmask 261120
        %v500 = vsel %vm498, %v496, 0
        %v503 = vsel %vm498, %v497, 0
        %505 = vmatprep.subr.bf16.mxu0 0
        %506 = vmatpush1.bf16.msra.mxu0 0
        %507 = vmatprep.subr.bf16.mxu0 0
        %508 = vmatpush1.bf16.msra.mxu0 0
        %509 = vmatprep.subr.bf16.mxu0 0
        %510 = vmatpush1.bf16.msra.mxu0 0
        %511 = vmatprep.subr.bf16.mxu0 0
        %512 = vmatpush1.bf16.msra.mxu0 0
        %513 = vmatprep.subr.bf16.mxu0 0
        %514 = vmatpush1.bf16.msra.mxu0 0
        %515 = vmatprep.subr.bf16.mxu0 0
        %516 = vmatpush1.bf16.msra.mxu0 0
        %517 = vmatprep.subr.bf16.mxu0 0
        %518 = vmatpush1.bf16.msra.mxu0 %v463
        %519 = vmatprep.subr.bf16.mxu0 0
        %520 = vmatpush1.bf16.msra.mxu0 %v462
        %521 = vmatprep.subr.bf16.mxu0 0
        %522 = vmatpush2.bf16.msra.mxu0 0
        %523 = vmatprep.subr.bf16.mxu0 0
        %524 = vmatpush2.bf16.msra.mxu0 0
        %525 = vmatprep.subr.bf16.mxu0 0
        %526 = vmatpush2.bf16.msra.mxu0 0
        %527 = vmatprep.subr.bf16.mxu0 0
        %528 = vmatpush2.bf16.msra.mxu0 0
        %529 = vmatprep.subr.bf16.mxu0 0
        %530 = vmatpush2.bf16.msra.mxu0 0
        %531 = vmatprep.subr.bf16.mxu0 0
        %532 = vmatpush2.bf16.msra.mxu0 0
        %533 = vmatprep.subr.bf16.mxu0 0
        %534 = vmatpush2.bf16.msra.mxu0 0
        %535 = vmatprep.subr.bf16.mxu0 0
        %536 = vmatpush2.bf16.msra.mxu0 0
        %537 = vmatprep.mubr.bf16.mxu0 0
        %538 = vmatmul.mubr.bf16.gmra.mxu0 %v500
        %v539 = vpop.f32.mrf.mxu0
        %v540 = vadd.f32 %v471, %v539
        %v541 = vpop.f32.mrf.mxu0
        %v542 = vpop.f32.mrf.mxu0
        %v543 = vadd.f32 %v476, %v542
        %v544 = vpop.f32.mrf.mxu0
        %545 = vmatprep.mubr.bf16.mxu0 0
        %546 = vmatmul.mubr.bf16.gmra.mxu0 %v503
        %v547 = vpop.f32.mrf.mxu0
        %v548 = vadd.f32 %v481, %v547
        %v549 = vpop.f32.mrf.mxu0
        %v550 = vpop.f32.mrf.mxu0
        %v551 = vadd.f32 %v486, %v550
        %v552 = vpop.f32.mrf.mxu0
        %553 = vdwg.mxu0
        %v554 = vmax.f32 %v540, 0.0
        %v555 = vmax.f32 %v543, 0.0
        %v556 = vmax.f32 %v548, 0.0
        %v557 = vmax.f32 %v551, 0.0
        %v558 = vld [vmem:[%s5] sm:$0x3]
        %v559 = vpack.c.bf16 %v555, %v554
        %v560 = vpack.c.bf16 %v557, %v556
        %v561 = vld [vmem:[%s6] sm:$0xf]
        %563 = vset.pattern.permute.xlu0 0
        %564 = vperm.xlu0 %563, %v561
        %v565 = vpop.permute.xlu0 %564
        %v568 = vsel %vm498, %v558, 0
        %570 = vmatprep.subr.bf16.mxu0 0
        %571 = vmatpush1.bf16.msra.mxu0 0
        %572 = vmatprep.subr.bf16.mxu0 0
        %573 = vmatpush1.bf16.msra.mxu0 0
        %574 = vmatprep.subr.bf16.mxu0 0
        %575 = vmatpush1.bf16.msra.mxu0 0
        %576 = vmatprep.subr.bf16.mxu0 0
        %577 = vmatpush1.bf16.msra.mxu0 0
        %578 = vmatprep.subr.bf16.mxu0 0
        %579 = vmatpush1.bf16.msra.mxu0 0
        %580 = vmatprep.subr.bf16.mxu0 0
        %581 = vmatpush1.bf16.msra.mxu0 0
        %582 = vmatprep.subr.bf16.mxu0 0
        %583 = vmatpush1.bf16.msra.mxu0 %v560
        %584 = vmatprep.subr.bf16.mxu0 0
        %585 = vmatpush1.bf16.msra.mxu0 %v559
        %586 = vmatprep.subr.bf16.mxu0 0
        %587 = vmatpush2.bf16.msra.mxu0 0
        %588 = vmatprep.subr.bf16.mxu0 0
        %589 = vmatpush2.bf16.msra.mxu0 0
        %590 = vmatprep.subr.bf16.mxu0 0
        %591 = vmatpush2.bf16.msra.mxu0 0
        %592 = vmatprep.subr.bf16.mxu0 0
        %593 = vmatpush2.bf16.msra.mxu0 0
        %594 = vmatprep.subr.bf16.mxu0 0
        %595 = vmatpush2.bf16.msra.mxu0 0
        %596 = vmatprep.subr.bf16.mxu0 0
        %597 = vmatpush2.bf16.msra.mxu0 0
        %598 = vmatprep.subr.bf16.mxu0 0
        %599 = vmatpush2.bf16.msra.mxu0 0
        %600 = vmatprep.subr.bf16.mxu0 0
        %601 = vmatpush2.bf16.msra.mxu0 0
        %602 = vmatprep.mubr.bf16.mxu0 0
        %603 = vmatmul.mubr.bf16.gmra.mxu0 %v568
        %v604 = vpop.f32.mrf.mxu0
        %v605 = vadd.f32 %v565, %v604
        %v606 = vpop.f32.mrf.mxu0
        %v607 = vpop.f32.mrf.mxu0
        %v608 = vpop.f32.mrf.mxu0
        %609 = vdwg.mxu0
        %610 = vst [vmem:[%s272] sm:$0xf] %v605
        %s611 = sand.u32 %s181, 1
        %s612 = scalar_lea.sflag [#allocation3], %s611
        %s613 = sand.u32 %s181, 1
        %s614 = smul.addr %s613, 4
        %s615 = scalar_lea.vmem [#allocation2], %s614
        // Predicated region
        $region49: #{value_net_forward.1} parent=47 // pred_check
          %p616 = pneg %p191
        $region50: #{value_net_forward.1} parent=47 // pred_check_branch
          %618 = sbr.rel (%p616) target = $region52
        $region51: #{value_net_forward.1} parent=47 // pred_region
          %s620 = ssub.s32 64, 64
          %621 = vsyncadd %s612, %s620
          %s622 = smul.addr %s21, 64
          %s623 = scalar_lea.hbm %s7, %s622
          %s625 = sshll.u32 %s615, 4
          %s626 = int_to_ptr.vmem [resolvable:$true] %s625
          %628 = dma.vmem_to_hbm [thread:$0]  %s626, 64, %s623, %s612
        $region52: #{value_net_forward.1} parent=47 // pred_fallthru
          _
      $region48: #{value_net_forward.1} parent=5 // pred_fallthru
        _
      %p629 = scmp.le.s32.totalorder 2, %s16
      // Predicated region
      $region53: #{value_net_forward.1} parent=5 // pred_check
        %p630 = pneg %p629
      $region54: #{value_net_forward.1} parent=5 // pred_check_branch
        %632 = sbr.rel (%p630) target = $region56
      $region55: #{value_net_forward.1} parent=5 // pred_region
        %s633 = ssub.s32 %s16, 2
        // Predicated region
        $region57: #{value_net_forward.1} parent=55 // pred_check
          %p634 = pneg %p197
        $region58: #{value_net_forward.1} parent=55 // pred_check_branch
          %636 = sbr.rel (%p634) target = $region60
        $region59: #{value_net_forward.1} parent=55 // pred_region
          %s637 = sand.u32 %s182, 1
          %s638 = scalar_lea.sflag [#allocation3], %s637
          %s639 = sand.u32 %s182, 1
          %s640 = smul.addr %s639, 4
          %s641 = scalar_lea.vmem [#allocation2], %s640
          %642 = dma.done %s638, 64
        $region60: #{value_net_forward.1} parent=55 // pred_fallthru
          _
      $region56: #{value_net_forward.1} parent=5 // pred_fallthru
        _
    $region6: #{value_net_forward.1} parent=1 // loop_footer
      %s20 = sadd.s32 1, %s16
    $region7: #{value_net_forward.1} parent=1 // loop_footer_branch
      %15 = sbr.rel target = $region3
    $region8: #{value_net_forward.1} parent=1 // loop_exit
      _
    %643 = vsyncpa [#allocation3], 1
    %s644 = scalar_lea.sflag [#allocation3], 1
    %645 = vsyncpa %s644, 1

</llo_original>
